<compile_context>
chip_gen: v7x
topology: tpu7x:2x2x1
jax: 0.10.0
libtpu: 0.0.40
codegen_flags: <defaults>
</compile_context>

<pallas_src>
import jax
import jax.numpy as jnp
from jax.experimental import pallas as pl
from jax.experimental.pallas import tpu as pltpu


def _round_up(x, m):
    return ((x + m - 1) // m) * m


def classify_head_kernel(ids_ref, mask_ref, emb_ref, w1_ref, b1_ref,
                         w2_ref, b2_ref, xfeat_ref, logits_ref):
    """Fused: in-kernel gather + masked mean pool -> mlp1 -> ReLU -> mlp2.

    ids_ref   : [bt, k, ml]   int32     token ids (batch tile)
    mask_ref  : [bt, k, ml]   float32   attention mask
    emb_ref   : [Vp, hs]      bfloat16  embedding table (vocab padded to 128)
    w1_ref    : [k*hs, hs]    bfloat16  mlp1 weight (x @ W1^T form)
    b1_ref    : [1, hs]       float32
    w2_ref    : [hs, Kp]      bfloat16  mlp2 weight (x @ W2^T form, lane-padded)
    b2_ref    : [1, Kp]       float32
    xfeat_ref : [bt, hs]      float32   mlp1 output (pre-ReLU), returned
    logits_ref: [bt, Kp]      float32   lane-dense logits slab
    """
    bt, k, ml = ids_ref.shape
    vp = emb_ref.shape[0]

    ids = ids_ref[...]                    # [bt, k, ml] int32
    mask = mask_ref[...]                  # [bt, k, ml] f32
    emb = emb_ref[...]                    # [Vp, hs] bf16

    # Hoisted vocab iota (lane axis = vocab, lane-dense 128 multiple).
    iota_v = jax.lax.broadcasted_iota(jnp.int32, (bt, ml, vp), 2)

    pooled_parts = []
    for j in range(k):                    # k is tiny (3): static unroll
        ids_j = ids[:, j, :]              # [bt, ml]
        m_j = mask[:, j, :]               # [bt, ml]
        denom = jnp.sum(m_j, axis=1, keepdims=True) + 1e-6     # [bt, 1]
        sm = m_j * pl.reciprocal(denom, approx=True)           # [bt, ml]
        # Mask-weighted vocab histogram; gather + pooling fused into one
        # MXU contraction over the vocab axis:  hist @ E == masked-mean(E[ids]).
        onehot = (ids_j[:, :, None] == iota_v).astype(jnp.float32)  # [bt,ml,Vp]
        hist = jnp.sum(sm[:, :, None] * onehot, axis=1)             # [bt, Vp]
        pooled_parts.append(
            jnp.dot(hist.astype(emb.dtype), emb,
                    preferred_element_type=jnp.float32))            # [bt, hs]

    # Concatenate the k pooled "CLS" vectors -> single fused mlp1 matmul
    # with contracting dim k*hs (one MXU push instead of k small ones).
    pooled_cat = jnp.concatenate(pooled_parts, axis=1)               # [bt, k*hs]
    x_feature = jnp.dot(pooled_cat.astype(w1_ref.dtype), w1_ref[...],
                        preferred_element_type=jnp.float32) + b1_ref[...]
    xfeat_ref[...] = x_feature

    x = jnp.maximum(x_feature, 0.0)                                  # ReLU
    logits = jnp.dot(x.astype(w2_ref.dtype), w2_ref[...],
                     preferred_element_type=jnp.float32) + b2_ref[...]
    logits_ref[...] = logits


def classify_forward(input_ids, att_masks, vec_idx_arr, params,
                     target_idx_arr=None, *, block_bs=256):
    """Mirrors Classify_model.forward (loss branch and inference branch)."""
    emb_table, w1, b1, w2, b2 = params
    bs, k, ml = input_ids.shape
    vocab, hs = emb_table.shape

    LANE, SUB = 128, 8
    vp = _round_up(vocab, LANE)           # lane-dense vocab axis
    kp = LANE                             # lane-dense logits slab (>= k)
    bt = min(_round_up(bs, SUB), block_bs)  # batch tile (sublane multiple)
    bs_pad = _round_up(bs, bt)
    grid_b = bs_pad // bt

    # Batch padding (padded rows have all-zero mask -> pooled = 0, sliced off).
    ids_p = jnp.zeros((bs_pad, k, ml), jnp.int32).at[:bs].set(
        input_ids.astype(jnp.int32))
    mask_p = jnp.zeros((bs_pad, k, ml), jnp.float32).at[:bs].set(
        att_masks.astype(jnp.float32))

    # Weights: nn.Linear stores [out, in]; feed the kernel x @ W^T form.
    # Matmul operands are bf16 (f32 accumulation in-kernel); biases stay f32.
    emb_p = jnp.zeros((vp, hs), jnp.bfloat16).at[:vocab].set(
        emb_table.astype(jnp.bfloat16))
    w1_t = jnp.transpose(w1).astype(jnp.bfloat16)                   # [k*hs, hs]
    w2_t = jnp.zeros((hs, kp), jnp.bfloat16).at[:, :k].set(
        jnp.transpose(w2).astype(jnp.bfloat16))                     # [hs, Kp]
    b1_2d = b1.reshape(1, hs).astype(jnp.float32)
    b2_2d = jnp.zeros((1, kp), jnp.float32).at[:, :k].set(
        b2.astype(jnp.float32))

    cost = pl.CostEstimate(
        flops=2 * bs_pad * (k * vp * hs + (k * hs) * hs + hs * kp)
              + 4 * bs_pad * k * ml * vp,
        transcendentals=0,
        bytes_accessed=int(ids_p.size * 4 + mask_p.size * 4 + emb_p.size * 2
                           + w1_t.size * 2 + w2_t.size * 2
                           + b1_2d.size * 4 + b2_2d.size * 4
                           + bs_pad * hs * 4 + bs_pad * kp * 4))

    x_feature_p, logits_p = pl.pallas_call(
        classify_head_kernel,
        out_shape=(
            jax.ShapeDtypeStruct((bs_pad, hs), jnp.float32),
            jax.ShapeDtypeStruct((bs_pad, kp), jnp.float32),
        ),
        grid=(grid_b,),
        in_specs=[
            pl.BlockSpec((bt, k, ml), lambda i: (i, 0, 0)),   # ids (tiled)
            pl.BlockSpec((bt, k, ml), lambda i: (i, 0, 0)),   # mask (tiled)
            pl.BlockSpec((vp, hs), lambda i: (0, 0)),         # emb table (resident)
            pl.BlockSpec((k * hs, hs), lambda i: (0, 0)),     # W1^T
            pl.BlockSpec((1, hs), lambda i: (0, 0)),          # b1
            pl.BlockSpec((hs, kp), lambda i: (0, 0)),         # W2^T (padded)
            pl.BlockSpec((1, kp), lambda i: (0, 0)),          # b2 (padded)
        ],
        out_specs=(
            pl.BlockSpec((bt, hs), lambda i: (i, 0)),         # x_feature
            pl.BlockSpec((bt, kp), lambda i: (i, 0)),         # logits slab
        ),
        compiler_params=pltpu.CompilerParams(
            dimension_semantics=("parallel",),
            vmem_limit_bytes=32 * 1024 * 1024),
        cost_estimate=cost,
    )(ids_p, mask_p, emb_p, w1_t, b1_2d, w2_t, b2_2d)

    x_feature = x_feature_p[:bs]
    logits = logits_p[:bs, :k]            # slice the lane-dense slab

    if target_idx_arr is not None:
        # CrossEntropyLoss (mean reduction) — glue in plain JAX.
        logp = jax.nn.log_softmax(logits, axis=-1)
        nll = -jnp.take_along_axis(logp, target_idx_arr[:, None], axis=1)[:, 0]
        return jnp.mean(nll)
    else:
        max_idx = jnp.argmax(logits, axis=1)                         # [bs]
        converted_max_idx = vec_idx_arr[jnp.arange(bs), max_idx]     # [bs]
        return converted_max_idx, x_feature


def init_params(key, vocab=50, hs=32, k=3):
    k0, k1, k2, k3, k4 = jax.random.split(key, 5)
    emb_table = jax.random.normal(k0, (vocab, hs), jnp.float32) * 0.1
    w1 = jax.random.normal(k1, (hs, k * hs), jnp.float32) * 0.05   # [out, in]
    b1 = jax.random.normal(k2, (hs,), jnp.float32) * 0.01
    w2 = jax.random.normal(k3, (k, hs), jnp.float32) * 0.05        # [out, in]
    b2 = jax.random.normal(k4, (k,), jnp.float32) * 0.01
    return emb_table, w1, b1, w2, b2


if __name__ == "__main__":
    bs, k, ml, hs, vocab = 2, 3, 8, 32, 50
    key = jax.random.PRNGKey(0)
    kp_, ki, km, kv, kt = jax.random.split(key, 5)

    params = init_params(kp_, vocab=vocab, hs=hs, k=k)

    input_ids = jax.random.randint(ki, (bs, k, ml), 0, vocab, jnp.int32)
    # attention mask: first positions valid, deterministic ragged lengths
    lengths = jnp.array([[ml, ml - 2, ml - 3], [ml - 1, ml, ml - 4]],
                        dtype=jnp.int32)
    att_masks = (jnp.arange(ml)[None, None, :] < lengths[:, :, None]
                 ).astype(jnp.int32)
    vec_idx_arr = jax.random.randint(kv, (bs, k), 0, 1000, jnp.int32)
    target_idx_arr = jax.random.randint(kt, (bs,), 0, k, jnp.int32)

    # Inference branch: (converted_max_idx, x_feature)
    converted_max_idx, x_feature = classify_forward(
        input_ids, att_masks, vec_idx_arr, params, target_idx_arr=None)
    jax.block_until_ready((converted_max_idx, x_feature))

    # Loss branch: scalar cross-entropy loss
    loss = classify_forward(
        input_ids, att_masks, vec_idx_arr, params,
        target_idx_arr=target_idx_arr)
    jax.block_until_ready(loss)

    assert converted_max_idx.shape == (bs,)
    assert x_feature.shape == (bs, hs)
    assert loss.shape == ()
    print("KERNEL_OK")
</pallas_src>

<mosaic_0001>
module attributes {stable_mosaic.version = 11 : i64} {
  func.func @classify_head_kernel(%arg0: i32, %arg1: memref<8x3x8xi32, #tpu.memory_space<vmem>>, %arg2: memref<8x3x8xf32, #tpu.memory_space<vmem>>, %arg3: memref<128x32xbf16, #tpu.memory_space<vmem>>, %arg4: memref<96x32xbf16, #tpu.memory_space<vmem>>, %arg5: memref<1x32xf32, #tpu.memory_space<vmem>>, %arg6: memref<32x128xbf16, #tpu.memory_space<vmem>>, %arg7: memref<1x128xf32, #tpu.memory_space<vmem>>, %arg8: memref<8x32xf32, #tpu.memory_space<vmem>>, %arg9: memref<8x128xf32, #tpu.memory_space<vmem>>) attributes {dimension_semantics = [#tpu.dimension_semantics<parallel>], iteration_bounds = array<i64: 1>, scalar_prefetch = 0 : i64, scratch_operands = 0 : i64, tpu.core_type = #tpu.core_type<tc>, window_params = [{transform_indices = @transform_0, window_bounds = array<i64: 8, 3, 8>}, {transform_indices = @transform_1, window_bounds = array<i64: 8, 3, 8>}, {pipeline_mode = #tpu.pipeline_mode<synchronous>, transform_indices = @transform_2, window_bounds = array<i64: 128, 32>}, {pipeline_mode = #tpu.pipeline_mode<synchronous>, transform_indices = @transform_3, window_bounds = array<i64: 96, 32>}, {pipeline_mode = #tpu.pipeline_mode<synchronous>, transform_indices = @transform_4, window_bounds = array<i64: 1, 32>}, {pipeline_mode = #tpu.pipeline_mode<synchronous>, transform_indices = @transform_5, window_bounds = array<i64: 32, 128>}, {pipeline_mode = #tpu.pipeline_mode<synchronous>, transform_indices = @transform_6, window_bounds = array<i64: 1, 128>}, {transform_indices = @transform_7, window_bounds = array<i64: 8, 32>}, {transform_indices = @transform_8, window_bounds = array<i64: 8, 128>}]} {
    %c0 = arith.constant 0 : index
    %c0_0 = arith.constant 0 : index
    %c0_1 = arith.constant 0 : index
    %0 = vector.load %arg1[%c0, %c0_0, %c0_1] : memref<8x3x8xi32, #tpu.memory_space<vmem>>, vector<8x3x8xi32>
    %c0_2 = arith.constant 0 : index
    %c0_3 = arith.constant 0 : index
    %c0_4 = arith.constant 0 : index
    %1 = vector.load %arg2[%c0_2, %c0_3, %c0_4] : memref<8x3x8xf32, #tpu.memory_space<vmem>>, vector<8x3x8xf32>
    %c0_5 = arith.constant 0 : index
    %c0_6 = arith.constant 0 : index
    %2 = vector.load %arg3[%c0_5, %c0_6] : memref<128x32xbf16, #tpu.memory_space<vmem>>, vector<128x32xbf16>
    %3 = tpu.iota {dimensions = array<i32: 2>} : vector<8x8x128xi32>
    %4 = vector.extract_strided_slice %0 {offsets = [0, 0, 0], sizes = [8, 1, 8], strides = [1, 1, 1]} : vector<8x3x8xi32> to vector<8x1x8xi32>
    %5 = vector.shape_cast %4 : vector<8x1x8xi32> to vector<8x8xi32>
    %6 = vector.extract_strided_slice %1 {offsets = [0, 0, 0], sizes = [8, 1, 8], strides = [1, 1, 1]} : vector<8x3x8xf32> to vector<8x1x8xf32>
    %7 = vector.shape_cast %6 : vector<8x1x8xf32> to vector<8x8xf32>
    %cst = arith.constant dense<0.000000e+00> : vector<8xf32>
    %8 = vector.multi_reduction <add>, %7, %cst [1] : vector<8x8xf32> to vector<8xf32>
    %9 = vector.shape_cast %8 : vector<8xf32> to vector<8x1xf32>
    %cst_7 = arith.constant 9.99999997E-7 : f32
    %10 = vector.broadcast %cst_7 : f32 to vector<8x1xf32>
    %11 = arith.addf %9, %10 : vector<8x1xf32>
    %12 = tpu.reciprocal %11 {approx = true} : vector<8x1xf32> -> vector<8x1xf32>
    %13 = vector.broadcast %12 : vector<8x1xf32> to vector<8x8xf32>
    %14 = arith.mulf %7, %13 : vector<8x8xf32>
    %15 = vector.shape_cast %5 : vector<8x8xi32> to vector<8x8x1xi32>
    %16 = vector.broadcast %15 : vector<8x8x1xi32> to vector<8x8x128xi32>
    %17 = arith.cmpi eq, %16, %3 : vector<8x8x128xi32>
    %18 = arith.extui %17 : vector<8x8x128xi1> to vector<8x8x128xi32>
    %19 = arith.sitofp %18 : vector<8x8x128xi32> to vector<8x8x128xf32>
    %20 = vector.shape_cast %14 : vector<8x8xf32> to vector<8x8x1xf32>
    %21 = vector.broadcast %20 : vector<8x8x1xf32> to vector<8x8x128xf32>
    %22 = arith.mulf %21, %19 : vector<8x8x128xf32>
    %cst_8 = arith.constant dense<0.000000e+00> : vector<8x128xf32>
    %23 = vector.multi_reduction <add>, %22, %cst_8 [1] : vector<8x8x128xf32> to vector<8x128xf32>
    %24 = arith.truncf %23 : vector<8x128xf32> to vector<8x128xbf16>
    %cst_9 = arith.constant dense<0.000000e+00> : vector<8x32xf32>
    %25 = tpu.matmul %24, %2, %cst_9 {dimension_numbers = #tpu.dot_dimension_numbers<[1], [0], [0], [1], [0, 0, 1, 1], [], []>} : vector<8x128xbf16>, vector<128x32xbf16>, vector<8x32xf32> -> vector<8x32xf32>
    %26 = vector.extract_strided_slice %0 {offsets = [0, 1, 0], sizes = [8, 1, 8], strides = [1, 1, 1]} : vector<8x3x8xi32> to vector<8x1x8xi32>
    %27 = vector.shape_cast %26 : vector<8x1x8xi32> to vector<8x8xi32>
    %28 = vector.extract_strided_slice %1 {offsets = [0, 1, 0], sizes = [8, 1, 8], strides = [1, 1, 1]} : vector<8x3x8xf32> to vector<8x1x8xf32>
    %29 = vector.shape_cast %28 : vector<8x1x8xf32> to vector<8x8xf32>
    %cst_10 = arith.constant dense<0.000000e+00> : vector<8xf32>
    %30 = vector.multi_reduction <add>, %29, %cst_10 [1] : vector<8x8xf32> to vector<8xf32>
    %31 = vector.shape_cast %30 : vector<8xf32> to vector<8x1xf32>
    %cst_11 = arith.constant 9.99999997E-7 : f32
    %32 = vector.broadcast %cst_11 : f32 to vector<8x1xf32>
    %33 = arith.addf %31, %32 : vector<8x1xf32>
    %34 = tpu.reciprocal %33 {approx = true} : vector<8x1xf32> -> vector<8x1xf32>
    %35 = vector.broadcast %34 : vector<8x1xf32> to vector<8x8xf32>
    %36 = arith.mulf %29, %35 : vector<8x8xf32>
    %37 = vector.shape_cast %27 : vector<8x8xi32> to vector<8x8x1xi32>
    %38 = vector.broadcast %37 : vector<8x8x1xi32> to vector<8x8x128xi32>
    %39 = arith.cmpi eq, %38, %3 : vector<8x8x128xi32>
    %40 = arith.extui %39 : vector<8x8x128xi1> to vector<8x8x128xi32>
    %41 = arith.sitofp %40 : vector<8x8x128xi32> to vector<8x8x128xf32>
    %42 = vector.shape_cast %36 : vector<8x8xf32> to vector<8x8x1xf32>
    %43 = vector.broadcast %42 : vector<8x8x1xf32> to vector<8x8x128xf32>
    %44 = arith.mulf %43, %41 : vector<8x8x128xf32>
    %cst_12 = arith.constant dense<0.000000e+00> : vector<8x128xf32>
    %45 = vector.multi_reduction <add>, %44, %cst_12 [1] : vector<8x8x128xf32> to vector<8x128xf32>
    %46 = arith.truncf %45 : vector<8x128xf32> to vector<8x128xbf16>
    %cst_13 = arith.constant dense<0.000000e+00> : vector<8x32xf32>
    %47 = tpu.matmul %46, %2, %cst_13 {dimension_numbers = #tpu.dot_dimension_numbers<[1], [0], [0], [1], [0, 0, 1, 1], [], []>} : vector<8x128xbf16>, vector<128x32xbf16>, vector<8x32xf32> -> vector<8x32xf32>
    %48 = vector.extract_strided_slice %0 {offsets = [0, 2, 0], sizes = [8, 1, 8], strides = [1, 1, 1]} : vector<8x3x8xi32> to vector<8x1x8xi32>
    %49 = vector.shape_cast %48 : vector<8x1x8xi32> to vector<8x8xi32>
    %50 = vector.extract_strided_slice %1 {offsets = [0, 2, 0], sizes = [8, 1, 8], strides = [1, 1, 1]} : vector<8x3x8xf32> to vector<8x1x8xf32>
    %51 = vector.shape_cast %50 : vector<8x1x8xf32> to vector<8x8xf32>
    %cst_14 = arith.constant dense<0.000000e+00> : vector<8xf32>
    %52 = vector.multi_reduction <add>, %51, %cst_14 [1] : vector<8x8xf32> to vector<8xf32>
    %53 = vector.shape_cast %52 : vector<8xf32> to vector<8x1xf32>
    %cst_15 = arith.constant 9.99999997E-7 : f32
    %54 = vector.broadcast %cst_15 : f32 to vector<8x1xf32>
    %55 = arith.addf %53, %54 : vector<8x1xf32>
    %56 = tpu.reciprocal %55 {approx = true} : vector<8x1xf32> -> vector<8x1xf32>
    %57 = vector.broadcast %56 : vector<8x1xf32> to vector<8x8xf32>
    %58 = arith.mulf %51, %57 : vector<8x8xf32>
    %59 = vector.shape_cast %49 : vector<8x8xi32> to vector<8x8x1xi32>
    %60 = vector.broadcast %59 : vector<8x8x1xi32> to vector<8x8x128xi32>
    %61 = arith.cmpi eq, %60, %3 : vector<8x8x128xi32>
    %62 = arith.extui %61 : vector<8x8x128xi1> to vector<8x8x128xi32>
    %63 = arith.sitofp %62 : vector<8x8x128xi32> to vector<8x8x128xf32>
    %64 = vector.shape_cast %58 : vector<8x8xf32> to vector<8x8x1xf32>
    %65 = vector.broadcast %64 : vector<8x8x1xf32> to vector<8x8x128xf32>
    %66 = arith.mulf %65, %63 : vector<8x8x128xf32>
    %cst_16 = arith.constant dense<0.000000e+00> : vector<8x128xf32>
    %67 = vector.multi_reduction <add>, %66, %cst_16 [1] : vector<8x8x128xf32> to vector<8x128xf32>
    %68 = arith.truncf %67 : vector<8x128xf32> to vector<8x128xbf16>
    %cst_17 = arith.constant dense<0.000000e+00> : vector<8x32xf32>
    %69 = tpu.matmul %68, %2, %cst_17 {dimension_numbers = #tpu.dot_dimension_numbers<[1], [0], [0], [1], [0, 0, 1, 1], [], []>} : vector<8x128xbf16>, vector<128x32xbf16>, vector<8x32xf32> -> vector<8x32xf32>
    %70 = tpu.concatenate %25, %47, %69 in 1 : vector<8x32xf32>, vector<8x32xf32>, vector<8x32xf32> -> vector<8x96xf32>
    %71 = arith.truncf %70 : vector<8x96xf32> to vector<8x96xbf16>
    %c0_18 = arith.constant 0 : index
    %c0_19 = arith.constant 0 : index
    %72 = vector.load %arg4[%c0_18, %c0_19] : memref<96x32xbf16, #tpu.memory_space<vmem>>, vector<96x32xbf16>
    %cst_20 = arith.constant dense<0.000000e+00> : vector<8x32xf32>
    %73 = tpu.matmul %71, %72, %cst_20 {dimension_numbers = #tpu.dot_dimension_numbers<[1], [0], [0], [1], [0, 0, 1, 1], [], []>} : vector<8x96xbf16>, vector<96x32xbf16>, vector<8x32xf32> -> vector<8x32xf32>
    %c0_21 = arith.constant 0 : index
    %c0_22 = arith.constant 0 : index
    %74 = vector.load %arg5[%c0_21, %c0_22] : memref<1x32xf32, #tpu.memory_space<vmem>>, vector<1x32xf32>
    %75 = vector.broadcast %74 : vector<1x32xf32> to vector<8x32xf32>
    %76 = arith.addf %73, %75 : vector<8x32xf32>
    %c0_23 = arith.constant 0 : index
    %c0_24 = arith.constant 0 : index
    %77 = vector.load %arg8[%c0_23, %c0_24] : memref<8x32xf32, #tpu.memory_space<vmem>>, vector<8x32xf32>
    tpu.vector_store %arg8[%c0_23, %c0_24], %76 {strides = array<i32>} : memref<8x32xf32, #tpu.memory_space<vmem>>, vector<8x32xf32>,
    %cst_25 = arith.constant 0.000000e+00 : f32
    %78 = vector.broadcast %cst_25 : f32 to vector<8x32xf32>
    %79 = arith.maximumf %76, %78 : vector<8x32xf32>
    %80 = arith.truncf %79 : vector<8x32xf32> to vector<8x32xbf16>
    %c0_26 = arith.constant 0 : index
    %c0_27 = arith.constant 0 : index
    %81 = vector.load %arg6[%c0_26, %c0_27] : memref<32x128xbf16, #tpu.memory_space<vmem>>, vector<32x128xbf16>
    %cst_28 = arith.constant dense<0.000000e+00> : vector<8x128xf32>
    %82 = tpu.matmul %80, %81, %cst_28 {dimension_numbers = #tpu.dot_dimension_numbers<[1], [0], [0], [1], [0, 0, 1, 1], [], []>} : vector<8x32xbf16>, vector<32x128xbf16>, vector<8x128xf32> -> vector<8x128xf32>
    %c0_29 = arith.constant 0 : index
    %c0_30 = arith.constant 0 : index
    %83 = vector.load %arg7[%c0_29, %c0_30] : memref<1x128xf32, #tpu.memory_space<vmem>>, vector<1x128xf32>
    %84 = vector.broadcast %83 : vector<1x128xf32> to vector<8x128xf32>
    %85 = arith.addf %82, %84 : vector<8x128xf32>
    %c0_31 = arith.constant 0 : index
    %c0_32 = arith.constant 0 : index
    %86 = vector.load %arg9[%c0_31, %c0_32] : memref<8x128xf32, #tpu.memory_space<vmem>>, vector<8x128xf32>
    tpu.vector_store %arg9[%c0_31, %c0_32], %85 {strides = array<i32>} : memref<8x128xf32, #tpu.memory_space<vmem>>, vector<8x128xf32>,
    return
  }
  func.func @transform_0(%arg0: i32) -> (i32, i32, i32) {
    %c0_i32 = arith.constant 0 : i32
    %c0_i32_0 = arith.constant 0 : i32
    %c0_i32_1 = arith.constant 0 : i32
    return %arg0, %c0_i32, %c0_i32_0 : i32, i32, i32
  }
  func.func @transform_1(%arg0: i32) -> (i32, i32, i32) {
    %c0_i32 = arith.constant 0 : i32
    %c0_i32_0 = arith.constant 0 : i32
    %c0_i32_1 = arith.constant 0 : i32
    return %arg0, %c0_i32, %c0_i32_0 : i32, i32, i32
  }
  func.func @transform_2(%arg0: i32) -> (i32, i32) {
    %c0_i32 = arith.constant 0 : i32
    %c0_i32_0 = arith.constant 0 : i32
    %c0_i32_1 = arith.constant 0 : i32
    return %c0_i32, %c0_i32_0 : i32, i32
  }
  func.func @transform_3(%arg0: i32) -> (i32, i32) {
    %c0_i32 = arith.constant 0 : i32
    %c0_i32_0 = arith.constant 0 : i32
    %c0_i32_1 = arith.constant 0 : i32
    return %c0_i32, %c0_i32_0 : i32, i32
  }
  func.func @transform_4(%arg0: i32) -> (i32, i32) {
    %c0_i32 = arith.constant 0 : i32
    %c0_i32_0 = arith.constant 0 : i32
    %c0_i32_1 = arith.constant 0 : i32
    return %c0_i32, %c0_i32_0 : i32, i32
  }
  func.func @transform_5(%arg0: i32) -> (i32, i32) {
    %c0_i32 = arith.constant 0 : i32
    %c0_i32_0 = arith.constant 0 : i32
    %c0_i32_1 = arith.constant 0 : i32
    return %c0_i32, %c0_i32_0 : i32, i32
  }
  func.func @transform_6(%arg0: i32) -> (i32, i32) {
    %c0_i32 = arith.constant 0 : i32
    %c0_i32_0 = arith.constant 0 : i32
    %c0_i32_1 = arith.constant 0 : i32
    return %c0_i32, %c0_i32_0 : i32, i32
  }
  func.func @transform_7(%arg0: i32) -> (i32, i32) {
    %c0_i32 = arith.constant 0 : i32
    %c0_i32_0 = arith.constant 0 : i32
    return %arg0, %c0_i32 : i32, i32
  }
  func.func @transform_8(%arg0: i32) -> (i32, i32) {
    %c0_i32 = arith.constant 0 : i32
    %c0_i32_0 = arith.constant 0 : i32
    return %arg0, %c0_i32 : i32, i32
  }
}

</mosaic_0001>

<llo_original>
// kernel: tpu_custom_call.1
$region0: #{tpu_custom_call.1}
  #allocation0 [shape = 'u32[]', space=smem, size = 0x4, offset = 0x4, fixed_abs, tag = 'smem constant byte address 0x4 - core index']
  #allocation1 [shape = 'u32[144,128]{1,0:T(1,128)}', space=vmem, size = 0x12000, scoped, tag = 'internal scratch']
  %s0 = inlined_call_operand.vmem [shape: s32[8,3,8], index: 0, kind: input, shape index: {}]
  %s1 = inlined_call_operand.vmem [shape: f32[8,3,8], index: 1, kind: input, shape index: {}]
  %s2 = inlined_call_operand.vmem [shape: bf16[128,32], index: 2, kind: input, shape index: {}]
  %s3 = inlined_call_operand.vmem [shape: bf16[96,32], index: 3, kind: input, shape index: {}]
  %s4 = inlined_call_operand.vmem [shape: f32[1,32], index: 4, kind: input, shape index: {}]
  %s5 = inlined_call_operand.vmem [shape: bf16[32,128], index: 5, kind: input, shape index: {}]
  %s6 = inlined_call_operand.vmem [shape: f32[1,128], index: 6, kind: input, shape index: {}]
  %s7 = inlined_call_operand.hbm [shape: f32[8,32], index: 7, kind: output, shape index: {0}]
  %s8 = inlined_call_operand.hbm [shape: f32[8,128], index: 8, kind: output, shape index: {1}]
  %9 = xla_tuple %s7, %s8
  %s10 = sld [smem:[#allocation0]]
  $region46: #{tpu_custom_call.1} parent=0
    _
  %s12 = ssub.s32 1, %s10
  %s13 = scalar_select 0, %s12, %s10
  $region1: #{tpu_custom_call.1} parent=0
    #allocation2 [shape = 'u8[4096]{0}', space=vmem, size = 0x1000, scoped, tag = 'output window, operand 0, single buffered']
    #allocation3 [shape = 's32[1]{0}', space=sflag, size = 0x4, scoped, tag = 'scoped memory for tpu_custom_call.1']
    #allocation4 [shape = 'u8[4096]{0}', space=vmem, size = 0x1000, scoped, tag = 'output window, operand 1, single buffered']
    #allocation5 [shape = 's32[1]{0}', space=sflag, size = 0x4, scoped, tag = 'scoped memory for tpu_custom_call.1']
    %14 = vsyncpa [#allocation3], 0
    %15 = vsyncpa [#allocation5], 0
    // Predicated region
    $region2: #{tpu_custom_call.1} parent=1 // pred_check
      _
    $region3: #{tpu_custom_call.1} parent=1 // pred_check_branch
      %17 = sbr.rel (0) target = $region5
    $region4: #{tpu_custom_call.1} parent=1 // pred_region
      _
    $region5: #{tpu_custom_call.1} parent=1 // pred_fallthru
      _
    // Predicated region
    $region6: #{tpu_custom_call.1} parent=1 // pred_check
      _
    $region7: #{tpu_custom_call.1} parent=1 // pred_check_branch
      %19 = sbr.rel (0) target = $region9
    $region8: #{tpu_custom_call.1} parent=1 // pred_region
      _
    $region9: #{tpu_custom_call.1} parent=1 // pred_fallthru
      _
    // Predicated region
    $region10: #{tpu_custom_call.1} parent=1 // pred_check
      _
    $region11: #{tpu_custom_call.1} parent=1 // pred_check_branch
      %21 = sbr.rel (0) target = $region13
    $region12: #{tpu_custom_call.1} parent=1 // pred_region
      _
    $region13: #{tpu_custom_call.1} parent=1 // pred_fallthru
      _
    // Predicated region
    $region14: #{tpu_custom_call.1} parent=1 // pred_check
      _
    $region15: #{tpu_custom_call.1} parent=1 // pred_check_branch
      %23 = sbr.rel (0) target = $region17
    $region16: #{tpu_custom_call.1} parent=1 // pred_region
      _
    $region17: #{tpu_custom_call.1} parent=1 // pred_fallthru
      _
    // Predicated region
    $region18: #{tpu_custom_call.1} parent=1 // pred_check
      _
    $region19: #{tpu_custom_call.1} parent=1 // pred_check_branch
      %25 = sbr.rel (0) target = $region21
    $region20: #{tpu_custom_call.1} parent=1 // pred_region
      _
    $region21: #{tpu_custom_call.1} parent=1 // pred_fallthru
      _
    // Predicated region
    $region22: #{tpu_custom_call.1} parent=1 // pred_check
      _
    $region23: #{tpu_custom_call.1} parent=1 // pred_check_branch
      %27 = sbr.rel (0) target = $region25
    $region24: #{tpu_custom_call.1} parent=1 // pred_region
      _
    $region25: #{tpu_custom_call.1} parent=1 // pred_fallthru
      _
    // Predicated region
    $region26: #{tpu_custom_call.1} parent=1 // pred_check
      _
    $region27: #{tpu_custom_call.1} parent=1 // pred_check_branch
      %29 = sbr.rel (0) target = $region29
    $region28: #{tpu_custom_call.1} parent=1 // pred_region
      _
    $region29: #{tpu_custom_call.1} parent=1 // pred_fallthru
      _
    %v31 = vld [vmem:[%s0] sm:$0x7]
    %v32 = vld [vmem:[%s0 + $0x4] sm:$0x7]
    %v33 = vld [vmem:[%s0 + $0x8] sm:$0x7]
    %v34 = vld [vmem:[%s0 + $0xc] sm:$0x7]
    %v35 = vld [vmem:[%s0 + $0x10] sm:$0x7]
    %v36 = vld [vmem:[%s0 + $0x14] sm:$0x7]
    %v37 = vld [vmem:[%s0 + $0x18] sm:$0x7]
    %v38 = vld [vmem:[%s0 + $0x1c] sm:$0x7]
    %v39 = vld [vmem:[%s1] sm:$0x7]
    %v40 = vld [vmem:[%s1 + $0x4] sm:$0x7]
    %v41 = vld [vmem:[%s1 + $0x8] sm:$0x7]
    %v42 = vld [vmem:[%s1 + $0xc] sm:$0x7]
    %v43 = vld [vmem:[%s1 + $0x10] sm:$0x7]
    %v44 = vld [vmem:[%s1 + $0x14] sm:$0x7]
    %v45 = vld [vmem:[%s1 + $0x18] sm:$0x7]
    %v46 = vld [vmem:[%s1 + $0x1c] sm:$0x7]
    %v47 = vld [vmem:[%s2] sm:$0xf]
    %v48 = vld [vmem:[%s2 + $0x4] sm:$0xf]
    %v49 = vld [vmem:[%s2 + $0x8] sm:$0xf]
    %v50 = vld [vmem:[%s2 + $0xc] sm:$0xf]
    %v51 = vld [vmem:[%s2 + $0x10] sm:$0xf]
    %v52 = vld [vmem:[%s2 + $0x14] sm:$0xf]
    %v53 = vld [vmem:[%s2 + $0x18] sm:$0xf]
    %v54 = vld [vmem:[%s2 + $0x1c] sm:$0xf]
    %v55 = vld [vmem:[%s2 + $0x20] sm:$0xf]
    %v56 = vld [vmem:[%s2 + $0x24] sm:$0xf]
    %v57 = vld [vmem:[%s2 + $0x28] sm:$0xf]
    %v58 = vld [vmem:[%s2 + $0x2c] sm:$0xf]
    %v59 = vld [vmem:[%s2 + $0x30] sm:$0xf]
    %v60 = vld [vmem:[%s2 + $0x34] sm:$0xf]
    %v61 = vld [vmem:[%s2 + $0x38] sm:$0xf]
    %v62 = vld [vmem:[%s2 + $0x3c] sm:$0xf]
    %v63 = vlaneseq
    %v64 = vand.u32 %v63, 127
    %v73 = vrot.slane %v40, 7
    %vm74 = vcmask 1041409
    %v75 = vsel %vm74, %v73, %v39
    %v76 = vrot.slane %v41, 6
    %vm77 = vcmask 1042434
    %v78 = vsel %vm77, %v76, %v75
    %v79 = vrot.slane %v42, 5
    %vm80 = vcmask 1043459
    %v81 = vsel %vm80, %v79, %v78
    %v82 = vrot.slane %v43, 4
    %vm83 = vcmask 1044484
    %v84 = vsel %vm83, %v82, %v81
    %v85 = vrot.slane %v44, 3
    %vm86 = vcmask 1045509
    %v87 = vsel %vm86, %v85, %v84
    %v88 = vrot.slane %v45, 2
    %vm89 = vcmask 1046534
    %v90 = vsel %vm89, %v88, %v87
    %v91 = vrot.slane %v46, 1
    %vm92 = vcmask 1047559
    %v93 = vsel %vm92, %v91, %v90
    %vm95 = vcmask 64512
    %v96 = vsel %vm95, %v93, 0.0
    %97 = vadd.xlane.f32.xlu0 %v96
    %v98 = vpop.xlane.xlu0 %97
    %v99 = vadd.f32 %v98, 1e-06
    %v100 = vrcp.pop %v99
    %v102 = vrot.slane %v100, 1
    %v103 = vrot.slane %v100, 2
    %v104 = vrot.slane %v100, 3
    %v105 = vrot.slane %v100, 4
    %v106 = vrot.slane %v100, 5
    %v107 = vrot.slane %v100, 6
    %v108 = vrot.slane %v100, 7
    %v117 = vmul.f32 %v39, %v100
    %v118 = vmul.f32 %v40, %v102
    %v119 = vmul.f32 %v41, %v103
    %v120 = vmul.f32 %v42, %v104
    %v121 = vmul.f32 %v43, %v105
    %v122 = vmul.f32 %v44, %v106
    %v123 = vmul.f32 %v45, %v107
    %v124 = vmul.f32 %v46, %v108
    %v125 = vlaneseq
    %v126 = vshrl.u32 %v125, 7
    %v127 = vsub.s32 0, %v126
    %v128 = vrot.slane %v31, %v127
    %130 = vbcast.lane.b32.xlu0 %v128, 256
    %v131 = vpop.permute.xlu0 %130
    %v132 = vlaneseq
    %v133 = vshrl.u32 %v132, 7
    %v134 = vsub.s32 0, %v133
    %v135 = vrot.slane %v32, %v134
    %137 = vbcast.lane.b32.xlu0 %v135, 256
    %v138 = vpop.permute.xlu0 %137
    %v139 = vlaneseq
    %v140 = vshrl.u32 %v139, 7
    %v141 = vsub.s32 0, %v140
    %v142 = vrot.slane %v33, %v141
    %144 = vbcast.lane.b32.xlu0 %v142, 256
    %v145 = vpop.permute.xlu0 %144
    %v146 = vlaneseq
    %v147 = vshrl.u32 %v146, 7
    %v148 = vsub.s32 0, %v147
    %v149 = vrot.slane %v34, %v148
    %151 = vbcast.lane.b32.xlu0 %v149, 256
    %v152 = vpop.permute.xlu0 %151
    %v153 = vlaneseq
    %v154 = vshrl.u32 %v153, 7
    %v155 = vsub.s32 0, %v154
    %v156 = vrot.slane %v35, %v155
    %158 = vbcast.lane.b32.xlu0 %v156, 256
    %v159 = vpop.permute.xlu0 %158
    %v160 = vlaneseq
    %v161 = vshrl.u32 %v160, 7
    %v162 = vsub.s32 0, %v161
    %v163 = vrot.slane %v36, %v162
    %165 = vbcast.lane.b32.xlu0 %v163, 256
    %v166 = vpop.permute.xlu0 %165
    %v167 = vlaneseq
    %v168 = vshrl.u32 %v167, 7
    %v169 = vsub.s32 0, %v168
    %v170 = vrot.slane %v37, %v169
    %172 = vbcast.lane.b32.xlu0 %v170, 256
    %v173 = vpop.permute.xlu0 %172
    %v174 = vlaneseq
    %v175 = vshrl.u32 %v174, 7
    %v176 = vsub.s32 0, %v175
    %v177 = vrot.slane %v38, %v176
    %179 = vbcast.lane.b32.xlu0 %v177, 256
    %v180 = vpop.permute.xlu0 %179
    %vm181 = vcmp.eq.s32.totalorder %v131, %v64
    %vm182 = vcmp.eq.s32.totalorder %v138, %v64
    %vm183 = vcmp.eq.s32.totalorder %v145, %v64
    %vm184 = vcmp.eq.s32.totalorder %v152, %v64
    %vm185 = vcmp.eq.s32.totalorder %v159, %v64
    %vm186 = vcmp.eq.s32.totalorder %v166, %v64
    %vm187 = vcmp.eq.s32.totalorder %v173, %v64
    %vm188 = vcmp.eq.s32.totalorder %v180, %v64
    %v189 = vsel %vm181, 1, 0
    %v190 = vsel %vm182, 1, 0
    %v191 = vsel %vm183, 1, 0
    %v192 = vsel %vm184, 1, 0
    %v193 = vsel %vm185, 1, 0
    %v194 = vsel %vm186, 1, 0
    %v195 = vsel %vm187, 1, 0
    %v196 = vsel %vm188, 1, 0
    %v197 = vcvt.s32.f32 %v189
    %v198 = vcvt.s32.f32 %v190
    %v199 = vcvt.s32.f32 %v191
    %v200 = vcvt.s32.f32 %v192
    %v201 = vcvt.s32.f32 %v193
    %v202 = vcvt.s32.f32 %v194
    %v203 = vcvt.s32.f32 %v195
    %v204 = vcvt.s32.f32 %v196
    %v205 = vlaneseq
    %v206 = vshrl.u32 %v205, 7
    %v207 = vsub.s32 0, %v206
    %v208 = vrot.slane %v117, %v207
    %210 = vbcast.lane.b32.xlu0 %v208, 256
    %v211 = vpop.permute.xlu0 %210
    %v212 = vlaneseq
    %v213 = vshrl.u32 %v212, 7
    %v214 = vsub.s32 0, %v213
    %v215 = vrot.slane %v118, %v214
    %217 = vbcast.lane.b32.xlu0 %v215, 256
    %v218 = vpop.permute.xlu0 %217
    %v219 = vlaneseq
    %v220 = vshrl.u32 %v219, 7
    %v221 = vsub.s32 0, %v220
    %v222 = vrot.slane %v119, %v221
    %224 = vbcast.lane.b32.xlu0 %v222, 256
    %v225 = vpop.permute.xlu0 %224
    %v226 = vlaneseq
    %v227 = vshrl.u32 %v226, 7
    %v228 = vsub.s32 0, %v227
    %v229 = vrot.slane %v120, %v228
    %231 = vbcast.lane.b32.xlu0 %v229, 256
    %v232 = vpop.permute.xlu0 %231
    %v233 = vlaneseq
    %v234 = vshrl.u32 %v233, 7
    %v235 = vsub.s32 0, %v234
    %v236 = vrot.slane %v121, %v235
    %238 = vbcast.lane.b32.xlu0 %v236, 256
    %v239 = vpop.permute.xlu0 %238
    %v240 = vlaneseq
    %v241 = vshrl.u32 %v240, 7
    %v242 = vsub.s32 0, %v241
    %v243 = vrot.slane %v122, %v242
    %245 = vbcast.lane.b32.xlu0 %v243, 256
    %v246 = vpop.permute.xlu0 %245
    %v247 = vlaneseq
    %v248 = vshrl.u32 %v247, 7
    %v249 = vsub.s32 0, %v248
    %v250 = vrot.slane %v123, %v249
    %252 = vbcast.lane.b32.xlu0 %v250, 256
    %v253 = vpop.permute.xlu0 %252
    %v254 = vlaneseq
    %v255 = vshrl.u32 %v254, 7
    %v256 = vsub.s32 0, %v255
    %v257 = vrot.slane %v124, %v256
    %259 = vbcast.lane.b32.xlu0 %v257, 256
    %v260 = vpop.permute.xlu0 %259
    %v261 = vmul.f32 %v211, %v197
    %v262 = vmul.f32 %v218, %v198
    %v263 = vmul.f32 %v225, %v199
    %v264 = vmul.f32 %v232, %v200
    %v265 = vmul.f32 %v239, %v201
    %v266 = vmul.f32 %v246, %v202
    %v267 = vmul.f32 %v253, %v203
    %v268 = vmul.f32 %v260, %v204
    %v269 = vrot.slane %v261, 4
    %v270 = vadd.f32 %v261, %v269
    %v271 = vrot.slane %v270, 2
    %v272 = vadd.f32 %v270, %v271
    %v273 = vrot.slane %v272, 1
    %v274 = vadd.f32 %v272, %v273
    %v275 = vrot.slane %v262, 4
    %v276 = vadd.f32 %v262, %v275
    %v277 = vrot.slane %v276, 2
    %v278 = vadd.f32 %v276, %v277
    %v279 = vrot.slane %v278, 1
    %v280 = vadd.f32 %v278, %v279
    %v281 = vrot.slane %v263, 4
    %v282 = vadd.f32 %v263, %v281
    %v283 = vrot.slane %v282, 2
    %v284 = vadd.f32 %v282, %v283
    %v285 = vrot.slane %v284, 1
    %v286 = vadd.f32 %v284, %v285
    %v287 = vrot.slane %v264, 4
    %v288 = vadd.f32 %v264, %v287
    %v289 = vrot.slane %v288, 2
    %v290 = vadd.f32 %v288, %v289
    %v291 = vrot.slane %v290, 1
    %v292 = vadd.f32 %v290, %v291
    %v293 = vrot.slane %v265, 4
    %v294 = vadd.f32 %v265, %v293
    %v295 = vrot.slane %v294, 2
    %v296 = vadd.f32 %v294, %v295
    %v297 = vrot.slane %v296, 1
    %v298 = vadd.f32 %v296, %v297
    %v299 = vrot.slane %v266, 4
    %v300 = vadd.f32 %v266, %v299
    %v301 = vrot.slane %v300, 2
    %v302 = vadd.f32 %v300, %v301
    %v303 = vrot.slane %v302, 1
    %v304 = vadd.f32 %v302, %v303
    %v305 = vrot.slane %v267, 4
    %v306 = vadd.f32 %v267, %v305
    %v307 = vrot.slane %v306, 2
    %v308 = vadd.f32 %v306, %v307
    %v309 = vrot.slane %v308, 1
    %v310 = vadd.f32 %v308, %v309
    %v311 = vrot.slane %v268, 4
    %v312 = vadd.f32 %v268, %v311
    %v313 = vrot.slane %v312, 2
    %v314 = vadd.f32 %v312, %v313
    %v315 = vrot.slane %v314, 1
    %v316 = vadd.f32 %v314, %v315
    %v317 = vpack.c.bf16 %v274, %v274
    %v318 = vpack.c.bf16 %v280, %v280
    %v319 = vpack.c.bf16 %v286, %v286
    %v320 = vpack.c.bf16 %v292, %v292
    %v321 = vpack.c.bf16 %v298, %v298
    %v322 = vpack.c.bf16 %v304, %v304
    %v323 = vpack.c.bf16 %v310, %v310
    %v324 = vpack.c.bf16 %v316, %v316
    %v333 = vunpack.c.l.b16 %v317
    %v334 = vunpack.c.l.b16 %v318
    %v335 = vunpack.c.l.b16 %v319
    %v336 = vunpack.c.l.b16 %v320
    %v337 = vunpack.c.l.b16 %v321
    %v338 = vunpack.c.l.b16 %v322
    %v339 = vunpack.c.l.b16 %v323
    %v340 = vunpack.c.l.b16 %v324
    %v341 = vsel %vm74, %v334, %v333
    %v342 = vsel %vm77, %v335, %v341
    %v343 = vsel %vm80, %v336, %v342
    %v344 = vsel %vm83, %v337, %v343
    %v345 = vsel %vm86, %v338, %v344
    %v346 = vsel %vm89, %v339, %v345
    %v347 = vsel %vm92, %v340, %v346
    %v348 = vpack.c.b16 %v347, %v347
    %v366 = vunpack.c.l.b16 %v47
    %v367 = vunpack.c.l.b16 %v48
    %v368 = vunpack.c.l.b16 %v49
    %v369 = vunpack.c.l.b16 %v50
    %v370 = vunpack.c.l.b16 %v51
    %v371 = vunpack.c.l.b16 %v52
    %v372 = vunpack.c.l.b16 %v53
    %v373 = vunpack.c.l.b16 %v54
    %v374 = vunpack.c.l.b16 %v55
    %v375 = vunpack.c.l.b16 %v56
    %v376 = vunpack.c.l.b16 %v57
    %v377 = vunpack.c.l.b16 %v58
    %v378 = vunpack.c.l.b16 %v59
    %v379 = vunpack.c.l.b16 %v60
    %v380 = vunpack.c.l.b16 %v61
    %v381 = vunpack.c.l.b16 %v62
    %v382 = vpack.c.b16 %v367, %v366
    %v383 = vpack.c.b16 %v369, %v368
    %v384 = vpack.c.b16 %v371, %v370
    %v385 = vpack.c.b16 %v373, %v372
    %v386 = vpack.c.b16 %v375, %v374
    %v387 = vpack.c.b16 %v377, %v376
    %v388 = vpack.c.b16 %v379, %v378
    %v389 = vpack.c.b16 %v381, %v380
    %398 = vmatprep.subr.bf16.mxu0 0
    %399 = vmatpush1.bf16.msra.mxu0 %v382
    %400 = vmatprep.subr.bf16.mxu0 0
    %401 = vmatpush1.bf16.msra.mxu0 %v383
    %402 = vmatprep.subr.bf16.mxu0 0
    %403 = vmatpush1.bf16.msra.mxu0 %v384
    %404 = vmatprep.subr.bf16.mxu0 0
    %405 = vmatpush1.bf16.msra.mxu0 %v385
    %406 = vmatprep.subr.bf16.mxu0 0
    %407 = vmatpush1.bf16.msra.mxu0 %v386
    %408 = vmatprep.subr.bf16.mxu0 0
    %409 = vmatpush1.bf16.msra.mxu0 %v387
    %410 = vmatprep.subr.bf16.mxu0 0
    %411 = vmatpush1.bf16.msra.mxu0 %v388
    %412 = vmatprep.subr.bf16.mxu0 0
    %413 = vmatpush1.bf16.msra.mxu0 %v389
    %414 = vmatprep.subr.bf16.mxu0 0
    %415 = vmatpush1.bf16.msra.mxu0 0
    %416 = vmatprep.subr.bf16.mxu0 0
    %417 = vmatpush1.bf16.msra.mxu0 0
    %418 = vmatprep.subr.bf16.mxu0 0
    %419 = vmatpush1.bf16.msra.mxu0 0
    %420 = vmatprep.subr.bf16.mxu0 0
    %421 = vmatpush1.bf16.msra.mxu0 0
    %422 = vmatprep.subr.bf16.mxu0 0
    %423 = vmatpush1.bf16.msra.mxu0 0
    %424 = vmatprep.subr.bf16.mxu0 0
    %425 = vmatpush1.bf16.msra.mxu0 0
    %426 = vmatprep.subr.bf16.mxu0 0
    %427 = vmatpush1.bf16.msra.mxu0 0
    %428 = vmatprep.subr.bf16.mxu0 0
    %429 = vmatpush1.bf16.msra.mxu0 0
    %430 = vmatprep.mubr.bf16.mxu0 0
    %431 = vmatmul.mubr.bf16.gmra.mrb[0].mxu0 %v348
    %v432 = vpop.f32.mrb[0].mxu0
    %v433 = vadd.f32 0.0, %v432
    %v434 = vpop.f32.mrb[0].mxu0
    %v435 = vpop.f32.mrb[0].mxu0
    %v436 = vpop.f32.mrb[0].mxu0
    %437 = vdwg.mxu0
    %v438 = vsel %vm77, %v73, %v39
    %v439 = vsel %vm80, %v76, %v438
    %v440 = vsel %vm83, %v79, %v439
    %v441 = vsel %vm86, %v82, %v440
    %v442 = vsel %vm89, %v85, %v441
    %v443 = vsel %vm92, %v88, %v442
    %vm446 = vcmask 64513
    %v447 = vsel %vm446, %v443, 0.0
    %448 = vadd.xlane.f32.xlu0 %v447
    %v449 = vpop.xlane.xlu0 %448
    %vm450 = vcmask 57344
    %v451 = vsel %vm450, %v91, 0.0
    %452 = vadd.xlane.f32.xlu0 %v451
    %v453 = vpop.xlane.xlu0 %452
    %v454 = vadd.f32 %v449, 1e-06
    %v455 = vadd.f32 %v453, 1e-06
    %v456 = vrcp.pop %v454
    %v457 = vrcp.pop %v455
    %v460 = vrot.slane %v456, 1
    %v461 = vrot.slane %v456, 2
    %v462 = vrot.slane %v456, 3
    %v463 = vrot.slane %v456, 4
    %v464 = vrot.slane %v456, 5
    %v465 = vrot.slane %v456, 6
    %v466 = vrot.slane %v457, 7
    %v475 = vmul.f32 %v39, %v456
    %v476 = vmul.f32 %v40, %v460
    %v477 = vmul.f32 %v41, %v461
    %v478 = vmul.f32 %v42, %v462
    %v479 = vmul.f32 %v43, %v463
    %v480 = vmul.f32 %v44, %v464
    %v481 = vmul.f32 %v45, %v465
    %v482 = vmul.f32 %v46, %v466
    %v483 = vlaneseq
    %v484 = vshrl.u32 %v483, 7
    %v485 = vsub.s32 1, %v484
    %v486 = vrot.slane %v31, %v485
    %488 = vbcast.lane.b32.xlu0 %v486, 256
    %v489 = vpop.permute.xlu0 %488
    %v490 = vlaneseq
    %v491 = vshrl.u32 %v490, 7
    %v492 = vsub.s32 1, %v491
    %v493 = vrot.slane %v32, %v492
    %495 = vbcast.lane.b32.xlu0 %v493, 256
    %v496 = vpop.permute.xlu0 %495
    %v497 = vlaneseq
    %v498 = vshrl.u32 %v497, 7
    %v499 = vsub.s32 1, %v498
    %v500 = vrot.slane %v33, %v499
    %502 = vbcast.lane.b32.xlu0 %v500, 256
    %v503 = vpop.permute.xlu0 %502
    %v504 = vlaneseq
    %v505 = vshrl.u32 %v504, 7
    %v506 = vsub.s32 1, %v505
    %v507 = vrot.slane %v34, %v506
    %509 = vbcast.lane.b32.xlu0 %v507, 256
    %v510 = vpop.permute.xlu0 %509
    %v511 = vlaneseq
    %v512 = vshrl.u32 %v511, 7
    %v513 = vsub.s32 1, %v512
    %v514 = vrot.slane %v35, %v513
    %516 = vbcast.lane.b32.xlu0 %v514, 256
    %v517 = vpop.permute.xlu0 %516
    %v518 = vlaneseq
    %v519 = vshrl.u32 %v518, 7
    %v520 = vsub.s32 1, %v519
    %v521 = vrot.slane %v36, %v520
    %523 = vbcast.lane.b32.xlu0 %v521, 256
    %v524 = vpop.permute.xlu0 %523
    %v525 = vlaneseq
    %v526 = vshrl.u32 %v525, 7
    %v527 = vsub.s32 1, %v526
    %v528 = vrot.slane %v37, %v527
    %530 = vbcast.lane.b32.xlu0 %v528, 256
    %v531 = vpop.permute.xlu0 %530
    %v532 = vlaneseq
    %v533 = vshrl.u32 %v532, 7
    %v534 = vsub.s32 1, %v533
    %v535 = vrot.slane %v38, %v534
    %537 = vbcast.lane.b32.xlu0 %v535, 256
    %v538 = vpop.permute.xlu0 %537
    %vm539 = vcmp.eq.s32.totalorder %v489, %v64
    %vm540 = vcmp.eq.s32.totalorder %v496, %v64
    %vm541 = vcmp.eq.s32.totalorder %v503, %v64
    %vm542 = vcmp.eq.s32.totalorder %v510, %v64
    %vm543 = vcmp.eq.s32.totalorder %v517, %v64
    %vm544 = vcmp.eq.s32.totalorder %v524, %v64
    %vm545 = vcmp.eq.s32.totalorder %v531, %v64
    %vm546 = vcmp.eq.s32.totalorder %v538, %v64
    %v547 = vsel %vm539, 1, 0
    %v548 = vsel %vm540, 1, 0
    %v549 = vsel %vm541, 1, 0
    %v550 = vsel %vm542, 1, 0
    %v551 = vsel %vm543, 1, 0
    %v552 = vsel %vm544, 1, 0
    %v553 = vsel %vm545, 1, 0
    %v554 = vsel %vm546, 1, 0
    %v555 = vcvt.s32.f32 %v547
    %v556 = vcvt.s32.f32 %v548
    %v557 = vcvt.s32.f32 %v549
    %v558 = vcvt.s32.f32 %v550
    %v559 = vcvt.s32.f32 %v551
    %v560 = vcvt.s32.f32 %v552
    %v561 = vcvt.s32.f32 %v553
    %v562 = vcvt.s32.f32 %v554
    %v563 = vlaneseq
    %v564 = vshrl.u32 %v563, 7
    %v565 = vsub.s32 1, %v564
    %v566 = vrot.slane %v475, %v565
    %568 = vbcast.lane.b32.xlu0 %v566, 256
    %v569 = vpop.permute.xlu0 %568
    %v570 = vlaneseq
    %v571 = vshrl.u32 %v570, 7
    %v572 = vsub.s32 1, %v571
    %v573 = vrot.slane %v476, %v572
    %575 = vbcast.lane.b32.xlu0 %v573, 256
    %v576 = vpop.permute.xlu0 %575
    %v577 = vlaneseq
    %v578 = vshrl.u32 %v577, 7
    %v579 = vsub.s32 1, %v578
    %v580 = vrot.slane %v477, %v579
    %582 = vbcast.lane.b32.xlu0 %v580, 256
    %v583 = vpop.permute.xlu0 %582
    %v584 = vlaneseq
    %v585 = vshrl.u32 %v584, 7
    %v586 = vsub.s32 1, %v585
    %v587 = vrot.slane %v478, %v586
    %589 = vbcast.lane.b32.xlu0 %v587, 256
    %v590 = vpop.permute.xlu0 %589
    %v591 = vlaneseq
    %v592 = vshrl.u32 %v591, 7
    %v593 = vsub.s32 1, %v592
    %v594 = vrot.slane %v479, %v593
    %596 = vbcast.lane.b32.xlu0 %v594, 256
    %v597 = vpop.permute.xlu0 %596
    %v598 = vlaneseq
    %v599 = vshrl.u32 %v598, 7
    %v600 = vsub.s32 1, %v599
    %v601 = vrot.slane %v480, %v600
    %603 = vbcast.lane.b32.xlu0 %v601, 256
    %v604 = vpop.permute.xlu0 %603
    %v605 = vlaneseq
    %v606 = vshrl.u32 %v605, 7
    %v607 = vsub.s32 1, %v606
    %v608 = vrot.slane %v481, %v607
    %610 = vbcast.lane.b32.xlu0 %v608, 256
    %v611 = vpop.permute.xlu0 %610
    %v612 = vlaneseq
    %v613 = vshrl.u32 %v612, 7
    %v614 = vsub.s32 1, %v613
    %v615 = vrot.slane %v482, %v614
    %617 = vbcast.lane.b32.xlu0 %v615, 256
    %v618 = vpop.permute.xlu0 %617
    %v619 = vmul.f32 %v569, %v555
    %v620 = vmul.f32 %v576, %v556
    %v621 = vmul.f32 %v583, %v557
    %v622 = vmul.f32 %v590, %v558
    %v623 = vmul.f32 %v597, %v559
    %v624 = vmul.f32 %v604, %v560
    %v625 = vmul.f32 %v611, %v561
    %v626 = vmul.f32 %v618, %v562
    %v627 = vrot.slane %v619, 4
    %v628 = vadd.f32 %v619, %v627
    %v629 = vrot.slane %v628, 2
    %v630 = vadd.f32 %v628, %v629
    %v631 = vrot.slane %v630, 1
    %v632 = vadd.f32 %v630, %v631
    %v633 = vrot.slane %v620, 4
    %v634 = vadd.f32 %v620, %v633
    %v635 = vrot.slane %v634, 2
    %v636 = vadd.f32 %v634, %v635
    %v637 = vrot.slane %v636, 1
    %v638 = vadd.f32 %v636, %v637
    %v639 = vrot.slane %v621, 4
    %v640 = vadd.f32 %v621, %v639
    %v641 = vrot.slane %v640, 2
    %v642 = vadd.f32 %v640, %v641
    %v643 = vrot.slane %v642, 1
    %v644 = vadd.f32 %v642, %v643
    %v645 = vrot.slane %v622, 4
    %v646 = vadd.f32 %v622, %v645
    %v647 = vrot.slane %v646, 2
    %v648 = vadd.f32 %v646, %v647
    %v649 = vrot.slane %v648, 1
    %v650 = vadd.f32 %v648, %v649
    %v651 = vrot.slane %v623, 4
    %v652 = vadd.f32 %v623, %v651
    %v653 = vrot.slane %v652, 2
    %v654 = vadd.f32 %v652, %v653
    %v655 = vrot.slane %v654, 1
    %v656 = vadd.f32 %v654, %v655
    %v657 = vrot.slane %v624, 4
    %v658 = vadd.f32 %v624, %v657
    %v659 = vrot.slane %v658, 2
    %v660 = vadd.f32 %v658, %v659
    %v661 = vrot.slane %v660, 1
    %v662 = vadd.f32 %v660, %v661
    %v663 = vrot.slane %v625, 4
    %v664 = vadd.f32 %v625, %v663
    %v665 = vrot.slane %v664, 2
    %v666 = vadd.f32 %v664, %v665
    %v667 = vrot.slane %v666, 1
    %v668 = vadd.f32 %v666, %v667
    %v669 = vrot.slane %v626, 4
    %v670 = vadd.f32 %v626, %v669
    %v671 = vrot.slane %v670, 2
    %v672 = vadd.f32 %v670, %v671
    %v673 = vrot.slane %v672, 1
    %v674 = vadd.f32 %v672, %v673
    %v675 = vpack.c.bf16 %v632, %v632
    %v676 = vpack.c.bf16 %v638, %v638
    %v677 = vpack.c.bf16 %v644, %v644
    %v678 = vpack.c.bf16 %v650, %v650
    %v679 = vpack.c.bf16 %v656, %v656
    %v680 = vpack.c.bf16 %v662, %v662
    %v681 = vpack.c.bf16 %v668, %v668
    %v682 = vpack.c.bf16 %v674, %v674
    %v691 = vunpack.c.l.b16 %v675
    %v692 = vunpack.c.l.b16 %v676
    %v693 = vunpack.c.l.b16 %v677
    %v694 = vunpack.c.l.b16 %v678
    %v695 = vunpack.c.l.b16 %v679
    %v696 = vunpack.c.l.b16 %v680
    %v697 = vunpack.c.l.b16 %v681
    %v698 = vunpack.c.l.b16 %v682
    %v699 = vsel %vm74, %v692, %v691
    %v700 = vsel %vm77, %v693, %v699
    %v701 = vsel %vm80, %v694, %v700
    %v702 = vsel %vm83, %v695, %v701
    %v703 = vsel %vm86, %v696, %v702
    %v704 = vsel %vm89, %v697, %v703
    %v705 = vsel %vm92, %v698, %v704
    %v706 = vpack.c.b16 %v705, %v705
    %708 = vmatprep.subr.bf16.mxu0 0
    %709 = vmatpush1.bf16.msra.mxu0 %v382
    %710 = vmatprep.subr.bf16.mxu0 0
    %711 = vmatpush1.bf16.msra.mxu0 %v383
    %712 = vmatprep.subr.bf16.mxu0 0
    %713 = vmatpush1.bf16.msra.mxu0 %v384
    %714 = vmatprep.subr.bf16.mxu0 0
    %715 = vmatpush1.bf16.msra.mxu0 %v385
    %716 = vmatprep.subr.bf16.mxu0 0
    %717 = vmatpush1.bf16.msra.mxu0 %v386
    %718 = vmatprep.subr.bf16.mxu0 0
    %719 = vmatpush1.bf16.msra.mxu0 %v387
    %720 = vmatprep.subr.bf16.mxu0 0
    %721 = vmatpush1.bf16.msra.mxu0 %v388
    %722 = vmatprep.subr.bf16.mxu0 0
    %723 = vmatpush1.bf16.msra.mxu0 %v389
    %724 = vmatprep.subr.bf16.mxu0 0
    %725 = vmatpush1.bf16.msra.mxu0 0
    %726 = vmatprep.subr.bf16.mxu0 0
    %727 = vmatpush1.bf16.msra.mxu0 0
    %728 = vmatprep.subr.bf16.mxu0 0
    %729 = vmatpush1.bf16.msra.mxu0 0
    %730 = vmatprep.subr.bf16.mxu0 0
    %731 = vmatpush1.bf16.msra.mxu0 0
    %732 = vmatprep.subr.bf16.mxu0 0
    %733 = vmatpush1.bf16.msra.mxu0 0
    %734 = vmatprep.subr.bf16.mxu0 0
    %735 = vmatpush1.bf16.msra.mxu0 0
    %736 = vmatprep.subr.bf16.mxu0 0
    %737 = vmatpush1.bf16.msra.mxu0 0
    %738 = vmatprep.subr.bf16.mxu0 0
    %739 = vmatpush1.bf16.msra.mxu0 0
    %740 = vmatprep.mubr.bf16.mxu0 0
    %741 = vmatmul.mubr.bf16.gmra.mrb[0].mxu0 %v706
    %v742 = vpop.f32.mrb[0].mxu0
    %v743 = vadd.f32 0.0, %v742
    %v744 = vpop.f32.mrb[0].mxu0
    %v745 = vpop.f32.mrb[0].mxu0
    %v746 = vpop.f32.mrb[0].mxu0
    %747 = vdwg.mxu0
    %v748 = vsel %vm80, %v73, %v39
    %v749 = vsel %vm83, %v76, %v748
    %v750 = vsel %vm86, %v79, %v749
    %v751 = vsel %vm89, %v82, %v750
    %v752 = vsel %vm92, %v85, %v751
    %v753 = vsel %vm74, %v91, %v88
    %vm756 = vcmask 64514
    %v757 = vsel %vm756, %v752, 0.0
    %758 = vadd.xlane.f32.xlu0 %v757
    %v759 = vpop.xlane.xlu0 %758
    %vm760 = vcmask 58368
    %v761 = vsel %vm760, %v753, 0.0
    %762 = vadd.xlane.f32.xlu0 %v761
    %v763 = vpop.xlane.xlu0 %762
    %v764 = vadd.f32 %v759, 1e-06
    %v765 = vadd.f32 %v763, 1e-06
    %v766 = vrcp.pop %v764
    %v767 = vrcp.pop %v765
    %v770 = vrot.slane %v766, 1
    %v771 = vrot.slane %v766, 2
    %v772 = vrot.slane %v766, 3
    %v773 = vrot.slane %v766, 4
    %v774 = vrot.slane %v766, 5
    %v775 = vrot.slane %v767, 6
    %v776 = vrot.slane %v767, 7
    %v785 = vmul.f32 %v39, %v766
    %v786 = vmul.f32 %v40, %v770
    %v787 = vmul.f32 %v41, %v771
    %v788 = vmul.f32 %v42, %v772
    %v789 = vmul.f32 %v43, %v773
    %v790 = vmul.f32 %v44, %v774
    %v791 = vmul.f32 %v45, %v775
    %v792 = vmul.f32 %v46, %v776
    %v793 = vlaneseq
    %v794 = vshrl.u32 %v793, 7
    %v795 = vsub.s32 2, %v794
    %v796 = vrot.slane %v31, %v795
    %798 = vbcast.lane.b32.xlu0 %v796, 256
    %v799 = vpop.permute.xlu0 %798
    %v800 = vlaneseq
    %v801 = vshrl.u32 %v800, 7
    %v802 = vsub.s32 2, %v801
    %v803 = vrot.slane %v32, %v802
    %805 = vbcast.lane.b32.xlu0 %v803, 256
    %v806 = vpop.permute.xlu0 %805
    %v807 = vlaneseq
    %v808 = vshrl.u32 %v807, 7
    %v809 = vsub.s32 2, %v808
    %v810 = vrot.slane %v33, %v809
    %812 = vbcast.lane.b32.xlu0 %v810, 256
    %v813 = vpop.permute.xlu0 %812
    %v814 = vlaneseq
    %v815 = vshrl.u32 %v814, 7
    %v816 = vsub.s32 2, %v815
    %v817 = vrot.slane %v34, %v816
    %819 = vbcast.lane.b32.xlu0 %v817, 256
    %v820 = vpop.permute.xlu0 %819
    %v821 = vlaneseq
    %v822 = vshrl.u32 %v821, 7
    %v823 = vsub.s32 2, %v822
    %v824 = vrot.slane %v35, %v823
    %826 = vbcast.lane.b32.xlu0 %v824, 256
    %v827 = vpop.permute.xlu0 %826
    %v828 = vlaneseq
    %v829 = vshrl.u32 %v828, 7
    %v830 = vsub.s32 2, %v829
    %v831 = vrot.slane %v36, %v830
    %833 = vbcast.lane.b32.xlu0 %v831, 256
    %v834 = vpop.permute.xlu0 %833
    %v835 = vlaneseq
    %v836 = vshrl.u32 %v835, 7
    %v837 = vsub.s32 2, %v836
    %v838 = vrot.slane %v37, %v837
    %840 = vbcast.lane.b32.xlu0 %v838, 256
    %v841 = vpop.permute.xlu0 %840
    %v842 = vlaneseq
    %v843 = vshrl.u32 %v842, 7
    %v844 = vsub.s32 2, %v843
    %v845 = vrot.slane %v38, %v844
    %847 = vbcast.lane.b32.xlu0 %v845, 256
    %v848 = vpop.permute.xlu0 %847
    %vm849 = vcmp.eq.s32.totalorder %v799, %v64
    %vm850 = vcmp.eq.s32.totalorder %v806, %v64
    %vm851 = vcmp.eq.s32.totalorder %v813, %v64
    %vm852 = vcmp.eq.s32.totalorder %v820, %v64
    %vm853 = vcmp.eq.s32.totalorder %v827, %v64
    %vm854 = vcmp.eq.s32.totalorder %v834, %v64
    %vm855 = vcmp.eq.s32.totalorder %v841, %v64
    %vm856 = vcmp.eq.s32.totalorder %v848, %v64
    %v857 = vsel %vm849, 1, 0
    %v858 = vsel %vm850, 1, 0
    %v859 = vsel %vm851, 1, 0
    %v860 = vsel %vm852, 1, 0
    %v861 = vsel %vm853, 1, 0
    %v862 = vsel %vm854, 1, 0
    %v863 = vsel %vm855, 1, 0
    %v864 = vsel %vm856, 1, 0
    %v865 = vcvt.s32.f32 %v857
    %v866 = vcvt.s32.f32 %v858
    %v867 = vcvt.s32.f32 %v859
    %v868 = vcvt.s32.f32 %v860
    %v869 = vcvt.s32.f32 %v861
    %v870 = vcvt.s32.f32 %v862
    %v871 = vcvt.s32.f32 %v863
    %v872 = vcvt.s32.f32 %v864
    %v873 = vlaneseq
    %v874 = vshrl.u32 %v873, 7
    %v875 = vsub.s32 2, %v874
    %v876 = vrot.slane %v785, %v875
    %878 = vbcast.lane.b32.xlu0 %v876, 256
    %v879 = vpop.permute.xlu0 %878
    %v880 = vlaneseq
    %v881 = vshrl.u32 %v880, 7
    %v882 = vsub.s32 2, %v881
    %v883 = vrot.slane %v786, %v882
    %885 = vbcast.lane.b32.xlu0 %v883, 256
    %v886 = vpop.permute.xlu0 %885
    %v887 = vlaneseq
    %v888 = vshrl.u32 %v887, 7
    %v889 = vsub.s32 2, %v888
    %v890 = vrot.slane %v787, %v889
    %892 = vbcast.lane.b32.xlu0 %v890, 256
    %v893 = vpop.permute.xlu0 %892
    %v894 = vlaneseq
    %v895 = vshrl.u32 %v894, 7
    %v896 = vsub.s32 2, %v895
    %v897 = vrot.slane %v788, %v896
    %899 = vbcast.lane.b32.xlu0 %v897, 256
    %v900 = vpop.permute.xlu0 %899
    %v901 = vlaneseq
    %v902 = vshrl.u32 %v901, 7
    %v903 = vsub.s32 2, %v902
    %v904 = vrot.slane %v789, %v903
    %906 = vbcast.lane.b32.xlu0 %v904, 256
    %v907 = vpop.permute.xlu0 %906
    %v908 = vlaneseq
    %v909 = vshrl.u32 %v908, 7
    %v910 = vsub.s32 2, %v909
    %v911 = vrot.slane %v790, %v910
    %913 = vbcast.lane.b32.xlu0 %v911, 256
    %v914 = vpop.permute.xlu0 %913
    %v915 = vlaneseq
    %v916 = vshrl.u32 %v915, 7
    %v917 = vsub.s32 2, %v916
    %v918 = vrot.slane %v791, %v917
    %920 = vbcast.lane.b32.xlu0 %v918, 256
    %v921 = vpop.permute.xlu0 %920
    %v922 = vlaneseq
    %v923 = vshrl.u32 %v922, 7
    %v924 = vsub.s32 2, %v923
    %v925 = vrot.slane %v792, %v924
    %927 = vbcast.lane.b32.xlu0 %v925, 256
    %v928 = vpop.permute.xlu0 %927
    %v929 = vmul.f32 %v879, %v865
    %v930 = vmul.f32 %v886, %v866
    %v931 = vmul.f32 %v893, %v867
    %v932 = vmul.f32 %v900, %v868
    %v933 = vmul.f32 %v907, %v869
    %v934 = vmul.f32 %v914, %v870
    %v935 = vmul.f32 %v921, %v871
    %v936 = vmul.f32 %v928, %v872
    %v937 = vrot.slane %v929, 4
    %v938 = vadd.f32 %v929, %v937
    %v939 = vrot.slane %v938, 2
    %v940 = vadd.f32 %v938, %v939
    %v941 = vrot.slane %v940, 1
    %v942 = vadd.f32 %v940, %v941
    %v943 = vrot.slane %v930, 4
    %v944 = vadd.f32 %v930, %v943
    %v945 = vrot.slane %v944, 2
    %v946 = vadd.f32 %v944, %v945
    %v947 = vrot.slane %v946, 1
    %v948 = vadd.f32 %v946, %v947
    %v949 = vrot.slane %v931, 4
    %v950 = vadd.f32 %v931, %v949
    %v951 = vrot.slane %v950, 2
    %v952 = vadd.f32 %v950, %v951
    %v953 = vrot.slane %v952, 1
    %v954 = vadd.f32 %v952, %v953
    %v955 = vrot.slane %v932, 4
    %v956 = vadd.f32 %v932, %v955
    %v957 = vrot.slane %v956, 2
    %v958 = vadd.f32 %v956, %v957
    %v959 = vrot.slane %v958, 1
    %v960 = vadd.f32 %v958, %v959
    %v961 = vrot.slane %v933, 4
    %v962 = vadd.f32 %v933, %v961
    %v963 = vrot.slane %v962, 2
    %v964 = vadd.f32 %v962, %v963
    %v965 = vrot.slane %v964, 1
    %v966 = vadd.f32 %v964, %v965
    %v967 = vrot.slane %v934, 4
    %v968 = vadd.f32 %v934, %v967
    %v969 = vrot.slane %v968, 2
    %v970 = vadd.f32 %v968, %v969
    %v971 = vrot.slane %v970, 1
    %v972 = vadd.f32 %v970, %v971
    %v973 = vrot.slane %v935, 4
    %v974 = vadd.f32 %v935, %v973
    %v975 = vrot.slane %v974, 2
    %v976 = vadd.f32 %v974, %v975
    %v977 = vrot.slane %v976, 1
    %v978 = vadd.f32 %v976, %v977
    %v979 = vrot.slane %v936, 4
    %v980 = vadd.f32 %v936, %v979
    %v981 = vrot.slane %v980, 2
    %v982 = vadd.f32 %v980, %v981
    %v983 = vrot.slane %v982, 1
    %v984 = vadd.f32 %v982, %v983
    %v985 = vpack.c.bf16 %v942, %v942
    %v986 = vpack.c.bf16 %v948, %v948
    %v987 = vpack.c.bf16 %v954, %v954
    %v988 = vpack.c.bf16 %v960, %v960
    %v989 = vpack.c.bf16 %v966, %v966
    %v990 = vpack.c.bf16 %v972, %v972
    %v991 = vpack.c.bf16 %v978, %v978
    %v992 = vpack.c.bf16 %v984, %v984
    %v1001 = vunpack.c.l.b16 %v985
    %v1002 = vunpack.c.l.b16 %v986
    %v1003 = vunpack.c.l.b16 %v987
    %v1004 = vunpack.c.l.b16 %v988
    %v1005 = vunpack.c.l.b16 %v989
    %v1006 = vunpack.c.l.b16 %v990
    %v1007 = vunpack.c.l.b16 %v991
    %v1008 = vunpack.c.l.b16 %v992
    %v1009 = vsel %vm74, %v1002, %v1001
    %v1010 = vsel %vm77, %v1003, %v1009
    %v1011 = vsel %vm80, %v1004, %v1010
    %v1012 = vsel %vm83, %v1005, %v1011
    %v1013 = vsel %vm86, %v1006, %v1012
    %v1014 = vsel %vm89, %v1007, %v1013
    %v1015 = vsel %vm92, %v1008, %v1014
    %v1016 = vpack.c.b16 %v1015, %v1015
    %1018 = vmatprep.subr.bf16.mxu0 0
    %1019 = vmatpush1.bf16.msra.mxu0 %v382
    %1020 = vmatprep.subr.bf16.mxu0 0
    %1021 = vmatpush1.bf16.msra.mxu0 %v383
    %1022 = vmatprep.subr.bf16.mxu0 0
    %1023 = vmatpush1.bf16.msra.mxu0 %v384
    %1024 = vmatprep.subr.bf16.mxu0 0
    %1025 = vmatpush1.bf16.msra.mxu0 %v385
    %1026 = vmatprep.subr.bf16.mxu0 0
    %1027 = vmatpush1.bf16.msra.mxu0 %v386
    %1028 = vmatprep.subr.bf16.mxu0 0
    %1029 = vmatpush1.bf16.msra.mxu0 %v387
    %1030 = vmatprep.subr.bf16.mxu0 0
    %1031 = vmatpush1.bf16.msra.mxu0 %v388
    %1032 = vmatprep.subr.bf16.mxu0 0
    %1033 = vmatpush1.bf16.msra.mxu0 %v389
    %1034 = vmatprep.subr.bf16.mxu0 0
    %1035 = vmatpush1.bf16.msra.mxu0 0
    %1036 = vmatprep.subr.bf16.mxu0 0
    %1037 = vmatpush1.bf16.msra.mxu0 0
    %1038 = vmatprep.subr.bf16.mxu0 0
    %1039 = vmatpush1.bf16.msra.mxu0 0
    %1040 = vmatprep.subr.bf16.mxu0 0
    %1041 = vmatpush1.bf16.msra.mxu0 0
    %1042 = vmatprep.subr.bf16.mxu0 0
    %1043 = vmatpush1.bf16.msra.mxu0 0
    %1044 = vmatprep.subr.bf16.mxu0 0
    %1045 = vmatpush1.bf16.msra.mxu0 0
    %1046 = vmatprep.subr.bf16.mxu0 0
    %1047 = vmatpush1.bf16.msra.mxu0 0
    %1048 = vmatprep.subr.bf16.mxu0 0
    %1049 = vmatpush1.bf16.msra.mxu0 0
    %1050 = vmatprep.mubr.bf16.mxu0 0
    %1051 = vmatmul.mubr.bf16.gmra.mrb[0].mxu0 %v1016
    %v1052 = vpop.f32.mrb[0].mxu0
    %v1053 = vadd.f32 0.0, %v1052
    %v1054 = vpop.f32.mrb[0].mxu0
    %v1055 = vpop.f32.mrb[0].mxu0
    %v1056 = vpop.f32.mrb[0].mxu0
    %1057 = vdwg.mxu0
    %1059 = vrot.lane.b32.xlu0 %v743, 32
    %v1060 = vpop.permute.xlu0 %1059
    %1063 = vrot.lane.b32.xlu0 %v1053, 64
    %v1064 = vpop.permute.xlu0 %1063
    %vm1066 = vcmask 261120
    %v1067 = vsel %vm1066, %v433, %v1060
    %vm1068 = vcmask 523264
    %v1069 = vsel %vm1068, %v1067, %v1064
    %v1070 = vpack.c.bf16 %v1069, %v1069
    %v1071 = vld [vmem:[%s3] sm:$0xf]
    %v1072 = vld [vmem:[%s3 + $0x4] sm:$0xf]
    %v1073 = vld [vmem:[%s3 + $0x8] sm:$0xf]
    %v1074 = vld [vmem:[%s3 + $0xc] sm:$0xf]
    %v1075 = vld [vmem:[%s3 + $0x10] sm:$0xf]
    %v1076 = vld [vmem:[%s3 + $0x14] sm:$0xf]
    %v1077 = vld [vmem:[%s3 + $0x18] sm:$0xf]
    %v1078 = vld [vmem:[%s3 + $0x1c] sm:$0xf]
    %v1079 = vld [vmem:[%s3 + $0x20] sm:$0xf]
    %v1080 = vld [vmem:[%s3 + $0x24] sm:$0xf]
    %v1081 = vld [vmem:[%s3 + $0x28] sm:$0xf]
    %v1082 = vld [vmem:[%s3 + $0x2c] sm:$0xf]
    %v1083 = vld [vmem:[%s4] sm:$0x1]
    %v1085 = vlaneseq
    %v1086 = vshrl.u32 %v1085, 7
    %v1087 = vsub.s32 0, %v1086
    %v1088 = vrot.slane %v1083, %v1087
    %v1102 = vunpack.c.l.b16 %v1071
    %v1103 = vunpack.c.l.b16 %v1072
    %v1104 = vunpack.c.l.b16 %v1073
    %v1105 = vunpack.c.l.b16 %v1074
    %v1106 = vunpack.c.l.b16 %v1075
    %v1107 = vunpack.c.l.b16 %v1076
    %v1108 = vunpack.c.l.b16 %v1077
    %v1109 = vunpack.c.l.b16 %v1078
    %v1110 = vunpack.c.l.b16 %v1079
    %v1111 = vunpack.c.l.b16 %v1080
    %v1112 = vunpack.c.l.b16 %v1081
    %v1113 = vunpack.c.l.b16 %v1082
    %v1114 = vpack.c.b16 %v1103, %v1102
    %v1115 = vpack.c.b16 %v1105, %v1104
    %v1116 = vpack.c.b16 %v1107, %v1106
    %v1117 = vpack.c.b16 %v1109, %v1108
    %v1118 = vpack.c.b16 %v1111, %v1110
    %v1119 = vpack.c.b16 %v1113, %v1112
    %vm1126 = vcmask 785408
    %v1128 = vsel %vm1126, %v1070, 0
    %1130 = vmatprep.subr.bf16.mxu0 0
    %1131 = vmatpush1.bf16.msra.mxu0 %v1114
    %1132 = vmatprep.subr.bf16.mxu0 0
    %1133 = vmatpush1.bf16.msra.mxu0 %v1115
    %1134 = vmatprep.subr.bf16.mxu0 0
    %1135 = vmatpush1.bf16.msra.mxu0 %v1116
    %1136 = vmatprep.subr.bf16.mxu0 0
    %1137 = vmatpush1.bf16.msra.mxu0 %v1117
    %1138 = vmatprep.subr.bf16.mxu0 0
    %1139 = vmatpush1.bf16.msra.mxu0 %v1118
    %1140 = vmatprep.subr.bf16.mxu0 0
    %1141 = vmatpush1.bf16.msra.mxu0 %v1119
    %1142 = vmatprep.subr.bf16.mxu0 0
    %1143 = vmatpush1.bf16.msra.mxu0 0
    %1144 = vmatprep.subr.bf16.mxu0 0
    %1145 = vmatpush1.bf16.msra.mxu0 0
    %1146 = vmatprep.subr.bf16.mxu0 0
    %1147 = vmatpush1.bf16.msra.mxu0 0
    %1148 = vmatprep.subr.bf16.mxu0 0
    %1149 = vmatpush1.bf16.msra.mxu0 0
    %1150 = vmatprep.subr.bf16.mxu0 0
    %1151 = vmatpush1.bf16.msra.mxu0 0
    %1152 = vmatprep.subr.bf16.mxu0 0
    %1153 = vmatpush1.bf16.msra.mxu0 0
    %1154 = vmatprep.subr.bf16.mxu0 0
    %1155 = vmatpush1.bf16.msra.mxu0 0
    %1156 = vmatprep.subr.bf16.mxu0 0
    %1157 = vmatpush1.bf16.msra.mxu0 0
    %1158 = vmatprep.subr.bf16.mxu0 0
    %1159 = vmatpush1.bf16.msra.mxu0 0
    %1160 = vmatprep.subr.bf16.mxu0 0
    %1161 = vmatpush1.bf16.msra.mxu0 0
    %1162 = vmatprep.mubr.bf16.mxu0 0
    %1163 = vmatmul.mubr.bf16.gmra.mrb[0].mxu0 %v1128
    %v1164 = vpop.f32.mrb[0].mxu0
    %v1165 = vadd.f32 %v1088, %v1164
    %v1166 = vpop.f32.mrb[0].mxu0
    %v1167 = vpop.f32.mrb[0].mxu0
    %v1168 = vpop.f32.mrb[0].mxu0
    %1169 = vdwg.mxu0
    %1170 = vst.msk [vmem:[#allocation2] sm:$0xff] %vm1066, %v1165
    %v1171 = vmax.f32 %v1165, 0.0
    %v1172 = vpack.c.bf16 %v1171, %v1171
    %v1173 = vld [vmem:[%s5] sm:$0xf]
    %v1174 = vld [vmem:[%s5 + $0x4] sm:$0xf]
    %v1175 = vld [vmem:[%s5 + $0x8] sm:$0xf]
    %v1176 = vld [vmem:[%s5 + $0xc] sm:$0xf]
    %v1177 = vld [vmem:[%s6] sm:$0x1]
    %v1179 = vlaneseq
    %v1180 = vshrl.u32 %v1179, 7
    %v1181 = vsub.s32 0, %v1180
    %v1182 = vrot.slane %v1177, %v1181
    %v1188 = vunpack.c.l.b16 %v1173
    %v1189 = vunpack.c.l.b16 %v1174
    %v1190 = vunpack.c.l.b16 %v1175
    %v1191 = vunpack.c.l.b16 %v1176
    %v1192 = vpack.c.b16 %v1189, %v1188
    %v1193 = vpack.c.b16 %v1191, %v1190
    %v1197 = vsel %vm1066, %v1172, 0
    %1199 = vmatprep.subr.bf16.mxu0 0
    %1200 = vmatpush1.bf16.msra.mxu0 %v1192
    %1201 = vmatprep.subr.bf16.mxu0 0
    %1202 = vmatpush1.bf16.msra.mxu0 %v1193
    %1203 = vmatprep.subr.bf16.mxu0 0
    %1204 = vmatpush1.bf16.msra.mxu0 0
    %1205 = vmatprep.subr.bf16.mxu0 0
    %1206 = vmatpush1.bf16.msra.mxu0 0
    %1207 = vmatprep.subr.bf16.mxu0 0
    %1208 = vmatpush1.bf16.msra.mxu0 0
    %1209 = vmatprep.subr.bf16.mxu0 0
    %1210 = vmatpush1.bf16.msra.mxu0 0
    %1211 = vmatprep.subr.bf16.mxu0 0
    %1212 = vmatpush1.bf16.msra.mxu0 0
    %1213 = vmatprep.subr.bf16.mxu0 0
    %1214 = vmatpush1.bf16.msra.mxu0 0
    %1215 = vmatprep.subr.bf16.mxu0 0
    %1216 = vmatpush1.bf16.msra.mxu0 0
    %1217 = vmatprep.subr.bf16.mxu0 0
    %1218 = vmatpush1.bf16.msra.mxu0 0
    %1219 = vmatprep.subr.bf16.mxu0 0
    %1220 = vmatpush1.bf16.msra.mxu0 0
    %1221 = vmatprep.subr.bf16.mxu0 0
    %1222 = vmatpush1.bf16.msra.mxu0 0
    %1223 = vmatprep.subr.bf16.mxu0 0
    %1224 = vmatpush1.bf16.msra.mxu0 0
    %1225 = vmatprep.subr.bf16.mxu0 0
    %1226 = vmatpush1.bf16.msra.mxu0 0
    %1227 = vmatprep.subr.bf16.mxu0 0
    %1228 = vmatpush1.bf16.msra.mxu0 0
    %1229 = vmatprep.subr.bf16.mxu0 0
    %1230 = vmatpush1.bf16.msra.mxu0 0
    %1231 = vmatprep.mubr.bf16.mxu0 0
    %1232 = vmatmul.mubr.bf16.gmra.mrb[0].mxu0 %v1197
    %v1233 = vpop.f32.mrb[0].mxu0
    %v1234 = vadd.f32 %v1182, %v1233
    %v1235 = vpop.f32.mrb[0].mxu0
    %v1236 = vpop.f32.mrb[0].mxu0
    %v1237 = vpop.f32.mrb[0].mxu0
    %1238 = vdwg.mxu0
    %1239 = vst [vmem:[#allocation4] sm:$0xff] %v1234
    // Predicated region
    $region30: #{tpu_custom_call.1} parent=1 // pred_check
      _
    $region31: #{tpu_custom_call.1} parent=1 // pred_check_branch
      %1241 = sbr.rel (0) target = $region33
    $region32: #{tpu_custom_call.1} parent=1 // pred_region
      %s1243 = ssub.s32 128, 128
      %1244 = vsyncadd [#allocation3], %s1243
      %s1246 = sshll.u32 [#allocation2], 4
      %s1247 = int_to_ptr.vmem [resolvable:$true] %s1246
      %1249 = dma.vmem_to_hbm [thread:$0]  %s1247, 128, %s7, [#allocation3]
    $region33: #{tpu_custom_call.1} parent=1 // pred_fallthru
      _
    // Predicated region
    $region34: #{tpu_custom_call.1} parent=1 // pred_check
      _
    $region35: #{tpu_custom_call.1} parent=1 // pred_check_branch
      %1251 = sbr.rel (0) target = $region37
    $region36: #{tpu_custom_call.1} parent=1 // pred_region
      %s1253 = ssub.s32 128, 128
      %1254 = vsyncadd [#allocation5], %s1253
      %s1256 = sshll.u32 [#allocation4], 4
      %s1257 = int_to_ptr.vmem [resolvable:$true] %s1256
      %1259 = dma.vmem_to_hbm [thread:$0]  %s1257, 128, %s8, [#allocation5]
    $region37: #{tpu_custom_call.1} parent=1 // pred_fallthru
      _
    // Predicated region
    $region38: #{tpu_custom_call.1} parent=1 // pred_check
      _
    $region39: #{tpu_custom_call.1} parent=1 // pred_check_branch
      %1261 = sbr.rel (0) target = $region41
    $region40: #{tpu_custom_call.1} parent=1 // pred_region
      %1262 = dma.done [#allocation3], 128
    $region41: #{tpu_custom_call.1} parent=1 // pred_fallthru
      _
    // Predicated region
    $region42: #{tpu_custom_call.1} parent=1 // pred_check
      _
    $region43: #{tpu_custom_call.1} parent=1 // pred_check_branch
      %1264 = sbr.rel (0) target = $region45
    $region44: #{tpu_custom_call.1} parent=1 // pred_region
      %1265 = dma.done [#allocation5], 128
    $region45: #{tpu_custom_call.1} parent=1 // pred_fallthru
      _
    %1266 = vsyncpa [#allocation3], 1
    %1267 = vsyncpa [#allocation5], 1

</llo_original>
